<compile_context>
chip_gen: v5e
topology: v5e:2x2
jax: 0.10.0
libtpu: 0.0.40
codegen_flags: <defaults>
</compile_context>

<pallas_src>
import jax
import jax.numpy as jnp
from jax.experimental import pallas as pl
from jax.experimental.pallas import tpu as pltpu

# Classic PointNet structure, scaled down to small synthetic sizes.
LAYER_SETS = [[8, 16], [16, 32], [32, 16, 8]]
INPUT_SIZE = 3
C_LOCAL = LAYER_SETS[0][-1]    # 16
C_GLOBAL = LAYER_SETS[1][-1]   # 32


def _layer_dims():
    """(C_out, C_in) of every Conv1d in forward order (NCW orientation)."""
    dims = []
    cin = INPUT_SIZE
    for c in LAYER_SETS[0]:
        dims.append((c, cin)); cin = c
    for c in LAYER_SETS[1]:
        dims.append((c, cin)); cin = c
    cin = C_LOCAL + C_GLOBAL            # concat(local, global)
    for c in LAYER_SETS[2]:
        dims.append((c, cin)); cin = c
    return dims


def _round8(n):
    return -(-n // 8) * 8


LAYER_DIMS = _layer_dims()
LAYER_OFFSETS = []
_r = 0
for (_co, _ci) in LAYER_DIMS:
    LAYER_OFFSETS.append(_r)
    _r += _round8(_co)
SLAB_ROWS = _r          # 112
SLAB_COLS = 128         # lane-aligned; max C_in+1 = 49 <= 128


# --------------------------------------------------------------------------
# Kernel
# --------------------------------------------------------------------------
def pointnet_kernel(x_ref, slab_ref, o_ref):
    """x_ref: (1, C_in, N); slab_ref: (SLAB_ROWS, 128); o_ref: (1, C_out, N)."""

    def relu(v):
        return jnp.maximum(v, 0.0)

    def dense(h, li):
        cout, cin = LAYER_DIMS[li]
        r0 = LAYER_OFFSETS[li]
        w = slab_ref[r0:r0 + cout, 0:cin]            # (cout, cin)
        b = slab_ref[r0:r0 + cout, cin:cin + 1]      # (cout, 1), broadcasts over N
        return jnp.dot(w, h, preferred_element_type=jnp.float32) + b

    h = x_ref[0]                                     # (C_in, N), N on lanes

    # ----- layer set 0 (produces local features) -----
    h = relu(dense(h, 0))
    h = relu(dense(h, 1))
    local = h                                        # (C_local, N)

    # ----- layer set 1 -----
    h = relu(dense(h, 2))
    h = relu(dense(h, 3))                            # (C_global, N)

    # ----- symmetric function (SymMax): max over the point axis -----
    g = jnp.max(h, axis=1, keepdims=True)            # (C_global, 1)

    # ----- layer set 2: first layer consumes concat(local, global) -----
    cout, cin = LAYER_DIMS[4]
    r0 = LAYER_OFFSETS[4]
    w_l = slab_ref[r0:r0 + cout, 0:C_LOCAL]                    # (cout, C_local)
    w_g = slab_ref[r0:r0 + cout, C_LOCAL:C_LOCAL + C_GLOBAL]   # (cout, C_global)
    b = slab_ref[r0:r0 + cout, cin:cin + 1]                    # (cout, 1)
    h = relu(jnp.dot(w_l, local, preferred_element_type=jnp.float32)
             + jnp.dot(w_g, g, preferred_element_type=jnp.float32)
             + b)
    h = relu(dense(h, 5))
    h = relu(dense(h, 6))                            # (C_out, N)

    o_ref[0] = h


# --------------------------------------------------------------------------
# Parameters
# --------------------------------------------------------------------------
def init_params(key):
    """Deterministic synthetic parameters; w: (C_out, C_in), b: (C_out,)."""
    params = []
    keys = jax.random.split(key, len(LAYER_DIMS))
    for i, (cout, cin) in enumerate(LAYER_DIMS):
        scale = 1.0 / jnp.sqrt(jnp.float32(cin))
        w = jax.random.normal(keys[i], (cout, cin), jnp.float32) * scale
        b = (0.01 * (i + 1)) * jnp.ones((cout,), jnp.float32)
        params.append((w, b))
    return params


def pack_params(params):
    """Pack all (w, b) into one (SLAB_ROWS, 128) f32 slab.

    Layer l occupies rows [LAYER_OFFSETS[l], +round8(C_out)); W at cols
    [0:C_in], bias at col C_in.  Rows/cols beyond that are zero padding.
    """
    slab = jnp.zeros((SLAB_ROWS, SLAB_COLS), jnp.float32)
    for li, (w, b) in enumerate(params):
        cout, cin = LAYER_DIMS[li]
        r0 = LAYER_OFFSETS[li]
        slab = slab.at[r0:r0 + cout, 0:cin].set(w)
        slab = slab.at[r0:r0 + cout, cin].set(b)
    return slab


# --------------------------------------------------------------------------
# Wrapper
# --------------------------------------------------------------------------
def pointnet_forward(x_ncw, slab):
    """x_ncw: (B, C_in, N) PyTorch Conv1d layout. Returns (B, C_out, N)."""
    B, C_in, N = x_ncw.shape
    assert C_in == INPUT_SIZE
    c_out = LAYER_SETS[2][-1]

    return pl.pallas_call(
        pointnet_kernel,
        out_shape=jax.ShapeDtypeStruct((B, c_out, N), jnp.float32),
        grid_spec=pltpu.PrefetchScalarGridSpec(
            num_scalar_prefetch=0,
            grid=(B,),
            in_specs=[
                pl.BlockSpec((1, C_in, N), lambda b: (b, 0, 0)),
                pl.BlockSpec((SLAB_ROWS, SLAB_COLS), lambda b: (0, 0)),
            ],
            out_specs=pl.BlockSpec((1, c_out, N), lambda b: (b, 0, 0)),
        ),
        compiler_params=pltpu.CompilerParams(
            dimension_semantics=("parallel",)),
    )(x_ncw, slab)


# --------------------------------------------------------------------------
# Pure-JAX reference (mirrors the PyTorch forward, NCW layout)
# --------------------------------------------------------------------------
def pointnet_reference(x_ncw, params):
    relu = lambda v: jnp.maximum(v, 0.0)

    def conv(h, w, b):
        return jnp.einsum('oc,bcn->bon', w, h) + b[None, :, None]

    ((w00, b00), (w01, b01), (w10, b10), (w11, b11),
     (w20, b20), (w21, b21), (w22, b22)) = params

    h = x_ncw
    h = relu(conv(h, w00, b00))
    h = relu(conv(h, w01, b01))
    local = h
    h = relu(conv(h, w10, b10))
    h = relu(conv(h, w11, b11))
    g = jnp.max(h, axis=2, keepdims=True)                         # (B, Cg, 1)
    g = jnp.broadcast_to(g, (h.shape[0], h.shape[1], x_ncw.shape[2]))
    h = jnp.concatenate([local, g], axis=1)                       # (B, Cl+Cg, N)
    h = relu(conv(h, w20, b20))
    h = relu(conv(h, w21, b21))
    h = relu(conv(h, w22, b22))
    return h


if __name__ == "__main__":
    key = jax.random.PRNGKey(0)
    k_x, k_p = jax.random.split(key)

    B, N = 2, 128   # N = 128 keeps the point axis lane-dense (unmasked stores)
    x = jax.random.normal(k_x, (B, INPUT_SIZE, N), jnp.float32)   # PyTorch NCW
    params = init_params(k_p)
    slab = pack_params(params)

    out = pointnet_forward(x, slab)
    out = jax.block_until_ready(out)

    ref = pointnet_reference(x, params)
    assert out.shape == (B, LAYER_SETS[2][-1], N), out.shape
    assert jnp.allclose(out, ref, rtol=1e-4, atol=1e-4), "mismatch vs reference"

    print("KERNEL_OK")
</pallas_src>

<mosaic_0001>
module attributes {stable_mosaic.version = 11 : i64} {
  func.func @pointnet_kernel(%arg0: i32, %arg1: memref<1x3x128xf32, #tpu.memory_space<vmem>>, %arg2: memref<128x128xf32, #tpu.memory_space<vmem>>, %arg3: memref<1x8x128xf32, #tpu.memory_space<vmem>>) attributes {dimension_semantics = [#tpu.dimension_semantics<parallel>], iteration_bounds = array<i64: 2>, scalar_prefetch = 0 : i64, scratch_operands = 0 : i64, tpu.core_type = #tpu.core_type<tc>, window_params = [{transform_indices = @transform_0, window_bounds = array<i64: 1, 3, 128>}, {pipeline_mode = #tpu.pipeline_mode<synchronous>, transform_indices = @transform_1, window_bounds = array<i64: 128, 128>}, {transform_indices = @transform_2, window_bounds = array<i64: 1, 8, 128>}]} {
    %c0 = arith.constant 0 : index
    %c0_0 = arith.constant 0 : index
    %c0_1 = arith.constant 0 : index
    %0 = vector.load %arg1[%c0, %c0_0, %c0_1] : memref<1x3x128xf32, #tpu.memory_space<vmem>>, vector<1x3x128xf32>
    %1 = vector.shape_cast %0 : vector<1x3x128xf32> to vector<3x128xf32>
    %c0_2 = arith.constant 0 : index
    %c0_3 = arith.constant 0 : index
    %2 = vector.load %arg2[%c0_2, %c0_3] : memref<128x128xf32, #tpu.memory_space<vmem>>, vector<8x3xf32>
    %c0_4 = arith.constant 0 : index
    %c3 = arith.constant 3 : index
    %3 = vector.load %arg2[%c0_4, %c3] : memref<128x128xf32, #tpu.memory_space<vmem>>, vector<8x1xf32>
    %cst = arith.constant dense<0.000000e+00> : vector<8x128xf32>
    %4 = tpu.matmul %2, %1, %cst {dimension_numbers = #tpu.dot_dimension_numbers<[1], [0], [0], [1], [0, 0, 1, 1], [], []>} : vector<8x3xf32>, vector<3x128xf32>, vector<8x128xf32> -> vector<8x128xf32>
    %5 = vector.broadcast %3 : vector<8x1xf32> to vector<8x128xf32>
    %6 = arith.addf %4, %5 : vector<8x128xf32>
    %cst_5 = arith.constant 0.000000e+00 : f32
    %7 = vector.broadcast %cst_5 : f32 to vector<8x128xf32>
    %8 = arith.maximumf %6, %7 : vector<8x128xf32>
    %c8 = arith.constant 8 : index
    %c0_6 = arith.constant 0 : index
    %9 = vector.load %arg2[%c8, %c0_6] : memref<128x128xf32, #tpu.memory_space<vmem>>, vector<16x8xf32>
    %c8_7 = arith.constant 8 : index
    %c8_8 = arith.constant 8 : index
    %10 = vector.load %arg2[%c8_7, %c8_8] : memref<128x128xf32, #tpu.memory_space<vmem>>, vector<16x1xf32>
    %cst_9 = arith.constant dense<0.000000e+00> : vector<16x128xf32>
    %11 = tpu.matmul %9, %8, %cst_9 {dimension_numbers = #tpu.dot_dimension_numbers<[1], [0], [0], [1], [0, 0, 1, 1], [], []>} : vector<16x8xf32>, vector<8x128xf32>, vector<16x128xf32> -> vector<16x128xf32>
    %12 = vector.broadcast %10 : vector<16x1xf32> to vector<16x128xf32>
    %13 = arith.addf %11, %12 : vector<16x128xf32>
    %cst_10 = arith.constant 0.000000e+00 : f32
    %14 = vector.broadcast %cst_10 : f32 to vector<16x128xf32>
    %15 = arith.maximumf %13, %14 : vector<16x128xf32>
    %c24 = arith.constant 24 : index
    %c0_11 = arith.constant 0 : index
    %16 = vector.load %arg2[%c24, %c0_11] : memref<128x128xf32, #tpu.memory_space<vmem>>, vector<16x16xf32>
    %c24_12 = arith.constant 24 : index
    %c16 = arith.constant 16 : index
    %17 = vector.load %arg2[%c24_12, %c16] : memref<128x128xf32, #tpu.memory_space<vmem>>, vector<16x1xf32>
    %cst_13 = arith.constant dense<0.000000e+00> : vector<16x128xf32>
    %18 = tpu.matmul %16, %15, %cst_13 {dimension_numbers = #tpu.dot_dimension_numbers<[1], [0], [0], [1], [0, 0, 1, 1], [], []>} : vector<16x16xf32>, vector<16x128xf32>, vector<16x128xf32> -> vector<16x128xf32>
    %19 = vector.broadcast %17 : vector<16x1xf32> to vector<16x128xf32>
    %20 = arith.addf %18, %19 : vector<16x128xf32>
    %cst_14 = arith.constant 0.000000e+00 : f32
    %21 = vector.broadcast %cst_14 : f32 to vector<16x128xf32>
    %22 = arith.maximumf %20, %21 : vector<16x128xf32>
    %c40 = arith.constant 40 : index
    %c0_15 = arith.constant 0 : index
    %23 = vector.load %arg2[%c40, %c0_15] : memref<128x128xf32, #tpu.memory_space<vmem>>, vector<32x16xf32>
    %c40_16 = arith.constant 40 : index
    %c16_17 = arith.constant 16 : index
    %24 = vector.load %arg2[%c40_16, %c16_17] : memref<128x128xf32, #tpu.memory_space<vmem>>, vector<32x1xf32>
    %cst_18 = arith.constant dense<0.000000e+00> : vector<32x128xf32>
    %25 = tpu.matmul %23, %22, %cst_18 {dimension_numbers = #tpu.dot_dimension_numbers<[1], [0], [0], [1], [0, 0, 1, 1], [], []>} : vector<32x16xf32>, vector<16x128xf32>, vector<32x128xf32> -> vector<32x128xf32>
    %26 = vector.broadcast %24 : vector<32x1xf32> to vector<32x128xf32>
    %27 = arith.addf %25, %26 : vector<32x128xf32>
    %cst_19 = arith.constant 0.000000e+00 : f32
    %28 = vector.broadcast %cst_19 : f32 to vector<32x128xf32>
    %29 = arith.maximumf %27, %28 : vector<32x128xf32>
    %cst_20 = arith.constant dense<0xFF800000> : vector<32xf32>
    %30 = vector.multi_reduction <maximumf>, %29, %cst_20 [1] : vector<32x128xf32> to vector<32xf32>
    %31 = vector.shape_cast %30 : vector<32xf32> to vector<32x1xf32>
    %c72 = arith.constant 72 : index
    %c0_21 = arith.constant 0 : index
    %32 = vector.load %arg2[%c72, %c0_21] : memref<128x128xf32, #tpu.memory_space<vmem>>, vector<32x16xf32>
    %c72_22 = arith.constant 72 : index
    %c16_23 = arith.constant 16 : index
    %33 = vector.load %arg2[%c72_22, %c16_23] : memref<128x128xf32, #tpu.memory_space<vmem>>, vector<32x32xf32>
    %c72_24 = arith.constant 72 : index
    %c48 = arith.constant 48 : index
    %34 = vector.load %arg2[%c72_24, %c48] : memref<128x128xf32, #tpu.memory_space<vmem>>, vector<32x1xf32>
    %cst_25 = arith.constant dense<0.000000e+00> : vector<32x128xf32>
    %35 = tpu.matmul %32, %15, %cst_25 {dimension_numbers = #tpu.dot_dimension_numbers<[1], [0], [0], [1], [0, 0, 1, 1], [], []>} : vector<32x16xf32>, vector<16x128xf32>, vector<32x128xf32> -> vector<32x128xf32>
    %cst_26 = arith.constant dense<0.000000e+00> : vector<32x1xf32>
    %36 = tpu.matmul %33, %31, %cst_26 {dimension_numbers = #tpu.dot_dimension_numbers<[1], [0], [0], [1], [0, 0, 1, 1], [], []>} : vector<32x32xf32>, vector<32x1xf32>, vector<32x1xf32> -> vector<32x1xf32>
    %37 = vector.broadcast %36 : vector<32x1xf32> to vector<32x128xf32>
    %38 = arith.addf %35, %37 : vector<32x128xf32>
    %39 = vector.broadcast %34 : vector<32x1xf32> to vector<32x128xf32>
    %40 = arith.addf %38, %39 : vector<32x128xf32>
    %cst_27 = arith.constant 0.000000e+00 : f32
    %41 = vector.broadcast %cst_27 : f32 to vector<32x128xf32>
    %42 = arith.maximumf %40, %41 : vector<32x128xf32>
    %c104 = arith.constant 104 : index
    %c0_28 = arith.constant 0 : index
    %43 = vector.load %arg2[%c104, %c0_28] : memref<128x128xf32, #tpu.memory_space<vmem>>, vector<16x32xf32>
    %c104_29 = arith.constant 104 : index
    %c32 = arith.constant 32 : index
    %44 = vector.load %arg2[%c104_29, %c32] : memref<128x128xf32, #tpu.memory_space<vmem>>, vector<16x1xf32>
    %cst_30 = arith.constant dense<0.000000e+00> : vector<16x128xf32>
    %45 = tpu.matmul %43, %42, %cst_30 {dimension_numbers = #tpu.dot_dimension_numbers<[1], [0], [0], [1], [0, 0, 1, 1], [], []>} : vector<16x32xf32>, vector<32x128xf32>, vector<16x128xf32> -> vector<16x128xf32>
    %46 = vector.broadcast %44 : vector<16x1xf32> to vector<16x128xf32>
    %47 = arith.addf %45, %46 : vector<16x128xf32>
    %cst_31 = arith.constant 0.000000e+00 : f32
    %48 = vector.broadcast %cst_31 : f32 to vector<16x128xf32>
    %49 = arith.maximumf %47, %48 : vector<16x128xf32>
    %c120 = arith.constant 120 : index
    %c0_32 = arith.constant 0 : index
    %50 = vector.load %arg2[%c120, %c0_32] : memref<128x128xf32, #tpu.memory_space<vmem>>, vector<8x16xf32>
    %c120_33 = arith.constant 120 : index
    %c16_34 = arith.constant 16 : index
    %51 = vector.load %arg2[%c120_33, %c16_34] : memref<128x128xf32, #tpu.memory_space<vmem>>, vector<8x1xf32>
    %cst_35 = arith.constant dense<0.000000e+00> : vector<8x128xf32>
    %52 = tpu.matmul %50, %49, %cst_35 {dimension_numbers = #tpu.dot_dimension_numbers<[1], [0], [0], [1], [0, 0, 1, 1], [], []>} : vector<8x16xf32>, vector<16x128xf32>, vector<8x128xf32> -> vector<8x128xf32>
    %53 = vector.broadcast %51 : vector<8x1xf32> to vector<8x128xf32>
    %54 = arith.addf %52, %53 : vector<8x128xf32>
    %cst_36 = arith.constant 0.000000e+00 : f32
    %55 = vector.broadcast %cst_36 : f32 to vector<8x128xf32>
    %56 = arith.maximumf %54, %55 : vector<8x128xf32>
    %c0_37 = arith.constant 0 : index
    %c0_38 = arith.constant 0 : index
    %c0_39 = arith.constant 0 : index
    %57 = vector.load %arg3[%c0_37, %c0_38, %c0_39] : memref<1x8x128xf32, #tpu.memory_space<vmem>>, vector<1x8x128xf32>
    %58 = vector.shape_cast %57 : vector<1x8x128xf32> to vector<8x128xf32>
    %59 = vector.shape_cast %56 : vector<8x128xf32> to vector<1x8x128xf32>
    tpu.vector_store %arg3[%c0_37, %c0_38, %c0_39], %59 {strides = array<i32>} : memref<1x8x128xf32, #tpu.memory_space<vmem>>, vector<1x8x128xf32>,
    return
  }
  func.func @transform_0(%arg0: i32) -> (i32, i32, i32) {
    %c0_i32 = arith.constant 0 : i32
    %c0_i32_0 = arith.constant 0 : i32
    %c0_i32_1 = arith.constant 0 : i32
    return %arg0, %c0_i32, %c0_i32_0 : i32, i32, i32
  }
  func.func @transform_1(%arg0: i32) -> (i32, i32) {
    %c0_i32 = arith.constant 0 : i32
    %c0_i32_0 = arith.constant 0 : i32
    %c0_i32_1 = arith.constant 0 : i32
    return %c0_i32, %c0_i32_0 : i32, i32
  }
  func.func @transform_2(%arg0: i32) -> (i32, i32, i32) {
    %c0_i32 = arith.constant 0 : i32
    %c0_i32_0 = arith.constant 0 : i32
    %c0_i32_1 = arith.constant 0 : i32
    return %arg0, %c0_i32, %c0_i32_0 : i32, i32, i32
  }
}

</mosaic_0001>

<llo_original>
// kernel: tpu_custom_call.1
$region0: #{tpu_custom_call.1}
  #allocation0 [shape = 'u32[]', space=smem, size = 0x4, offset = 0x4, fixed_abs, tag = 'smem constant byte address 0x4 - core index']
  #allocation1 [shape = 'u32[72,128]{1,0:T(1,128)}', space=vmem, size = 0x9000, scoped, tag = 'internal scratch']
  %s0 = inlined_call_operand.vmem [shape: f32[2,3,128], index: 0, kind: input, shape index: {}]
  %s1 = inlined_call_operand.hbm [shape: f32[128,128], index: 1, kind: input, shape index: {}]
  %s2 = inlined_call_operand.hbm [shape: f32[2,8,128], index: 2, kind: output, shape index: {}]
  %s3 = sld [smem:[#allocation0]]
  $region45: #{tpu_custom_call.1} parent=0
    _
  %s5 = ssub.s32 1, %s3
  %s6 = scalar_select 0, %s5, %s3
  $region1: #{tpu_custom_call.1} parent=0
    #allocation2 [shape = 'u8[65536]{0}', space=vmem, size = 0x10000, scoped, tag = 'input window, operand 1, single buffered']
    #allocation3 [shape = 's32[2]{0}', space=sflag, size = 0x8, scoped, tag = 'scoped memory for tpu_custom_call.1']
    #allocation4 [shape = 's32[2]{0}', space=sflag, size = 0x8, scoped, tag = 'scoped memory for tpu_custom_call.1']
    #allocation5 [shape = 'u8[8192]{0}', space=vmem, size = 0x2000, scoped, tag = 'output window, operand 0']
    %7 = vsyncpa [#allocation3], 0
    %8 = vsyncpa [#allocation4], 0
    %s9 = scalar_lea.sflag [#allocation4], 1
    %10 = vsyncpa %s9, 0
    loop: start=0, step=1, limit=4
    $region2: #{tpu_custom_call.1} parent=1 // loop_pre_header
      _
    $region3: #{tpu_custom_call.1} parent=1 // loop_header
      %s12 = sphi 0, %s16
      %p13 = scmp.ge.s32.totalorder %s12, 4
      %s22 = sphi 0, %s24
      %s25 = sphi 0, %s22
      %s26 = sphi 0, %s25
      %s42 = sphi 0, %s26
      %s46 = sphi 0, %s46
      %s48 = sphi 0, %s46
      %s49 = sphi 0, %s48
      %s63 = sphi 0, %s49
      %s69 = sphi 0, %s71
      %s72 = sphi 0, %s69
      %s73 = sphi 0, %s72
      %s89 = sphi 0, %s73
    $region4: #{tpu_custom_call.1} parent=1 // loop_header_branch
      %15 = sbr.rel (%p13) target = $region8
    $region5: #{tpu_custom_call.1} parent=1 // loop_body
      %s17 = ssub.s32 %s12, 1
      %s18 = ssub.s32 %s12, 2
      %s19 = sadd.s32 %s12, 1
      %s20 = ssub.s32 %s12, %s19
      %p21 = scmp.eq.s32.totalorder %s20, 0
      %s23 = sadd.s32 %s22, 1
      %s24 = scalar_select %p21, %s22, %s23
      %p27 = pneg %p21
      %p28 = scmp.eq.s32.totalorder %s12, 1
      %p29 = por %p27, %p28
      %p30 = scmp.ne.s32.totalorder %s22, %s25
      %p31 = scmp.eq.s32.totalorder %s12, 0
      %p32 = por %p30, %p31
      %p33 = scmp.ne.s32.totalorder %s22, %s25
      %p34 = scmp.eq.s32.totalorder %s17, 1
      %p35 = por %p33, %p34
      %p36 = scmp.ne.s32.totalorder %s25, %s26
      %p37 = scmp.eq.s32.totalorder %s17, 0
      %p38 = por %p36, %p37
      %p39 = scmp.ne.s32.totalorder %s25, %s26
      %p40 = scmp.eq.s32.totalorder %s18, 1
      %p41 = por %p39, %p40
      %p43 = scmp.ne.s32.totalorder %s26, %s42
      %p44 = scmp.eq.s32.totalorder %s18, 0
      %p45 = por %p43, %p44
      %s47 = sadd.s32 %s46, 1
      %p50 = scmp.eq.s32.totalorder %s12, 1
      %p51 = scmp.ne.s32.totalorder %s46, %s48
      %p52 = scmp.eq.s32.totalorder %s12, 0
      %p53 = por %p51, %p52
      %p54 = scmp.ne.s32.totalorder %s46, %s48
      %p55 = scmp.eq.s32.totalorder %s17, 1
      %p56 = por %p54, %p55
      %p57 = scmp.ne.s32.totalorder %s48, %s49
      %p58 = scmp.eq.s32.totalorder %s17, 0
      %p59 = por %p57, %p58
      %p60 = scmp.ne.s32.totalorder %s48, %s49
      %p61 = scmp.eq.s32.totalorder %s18, 1
      %p62 = por %p60, %p61
      %p64 = scmp.ne.s32.totalorder %s49, %s63
      %p65 = scmp.eq.s32.totalorder %s18, 0
      %p66 = por %p64, %p65
      %s67 = ssub.s32 %s12, %s19
      %p68 = scmp.eq.s32.totalorder %s67, 0
      %s70 = sadd.s32 %s69, 1
      %s71 = scalar_select %p68, %s69, %s70
      %p74 = pneg %p68
      %p75 = scmp.eq.s32.totalorder %s12, 1
      %p76 = por %p74, %p75
      %p77 = scmp.ne.s32.totalorder %s69, %s72
      %p78 = scmp.eq.s32.totalorder %s12, 0
      %p79 = por %p77, %p78
      %p80 = scmp.ne.s32.totalorder %s69, %s72
      %p81 = scmp.eq.s32.totalorder %s17, 1
      %p82 = por %p80, %p81
      %p83 = scmp.ne.s32.totalorder %s72, %s73
      %p84 = scmp.eq.s32.totalorder %s17, 0
      %p85 = por %p83, %p84
      %p86 = scmp.ne.s32.totalorder %s72, %s73
      %p87 = scmp.eq.s32.totalorder %s18, 1
      %p88 = por %p86, %p87
      %p90 = scmp.ne.s32.totalorder %s73, %s89
      %p91 = scmp.eq.s32.totalorder %s18, 0
      %p92 = por %p90, %p91
      %p93 = scmp.le.s32.totalorder 1, %s12
      %p94 = scmp.lt.s32.totalorder %s12, 3
      %p95 = pnand %p93, %p94
      %p96 = pneg %p95
      // Predicated region
      $region9: #{tpu_custom_call.1} parent=5 // pred_check
        _
      $region10: #{tpu_custom_call.1} parent=5 // pred_check_branch
        %98 = sbr.rel (%p95) target = $region12
      $region11: #{tpu_custom_call.1} parent=5 // pred_region
        %s99 = ssub.s32 %s12, 1
        // Predicated region
        $region13: #{tpu_custom_call.1} parent=11 // pred_check
          %p100 = pneg %p59
        $region14: #{tpu_custom_call.1} parent=11 // pred_check_branch
          %102 = sbr.rel (%p100) target = $region16
        $region15: #{tpu_custom_call.1} parent=11 // pred_region
          %104 = vsyncadd [#allocation3], 0
          %s105 = sshll.u32 %s1, 4
          %s106 = int_to_ptr.hbm [resolvable:$true] %s105
          %s107 = sshll.u32 [#allocation2], 4
          %s108 = int_to_ptr.vmem [resolvable:$true] %s107
          %113 = dma.hbm_to_vmem [thread:$0]  %s106, 2048, %s108, [#allocation3], 128, 128, 8
        $region16: #{tpu_custom_call.1} parent=11 // pred_fallthru
          _
      $region12: #{tpu_custom_call.1} parent=5 // pred_fallthru
        _
      %p114 = scmp.lt.s32.totalorder %s12, 2
      // Predicated region
      $region17: #{tpu_custom_call.1} parent=5 // pred_check
        %p115 = pneg %p114
      $region18: #{tpu_custom_call.1} parent=5 // pred_check_branch
        %117 = sbr.rel (%p115) target = $region20
      $region19: #{tpu_custom_call.1} parent=5 // pred_region
        // Predicated region
        $region21: #{tpu_custom_call.1} parent=19 // pred_check
          %p118 = pneg %p32
        $region22: #{tpu_custom_call.1} parent=19 // pred_check_branch
          %120 = sbr.rel (%p118) target = $region24
        $region23: #{tpu_custom_call.1} parent=19 // pred_region
          %p121 = scmp.lt.s32.totalorder %s12, 1
          %s122 = scalar_select %p121, %s12, 1
          %s123 = smul.addr %s122, 4
          %s124 = scalar_lea.vmem %s0, %s123
        $region24: #{tpu_custom_call.1} parent=19 // pred_fallthru
          _
      $region20: #{tpu_custom_call.1} parent=5 // pred_fallthru
        _
      %p125 = scmp.le.s32.totalorder 1, %s12
      %p126 = scmp.lt.s32.totalorder %s12, 3
      %p127 = pnand %p125, %p126
      %p128 = pneg %p127
      // Predicated region
      $region25: #{tpu_custom_call.1} parent=5 // pred_check
        _
      $region26: #{tpu_custom_call.1} parent=5 // pred_check_branch
        %130 = sbr.rel (%p127) target = $region28
      $region27: #{tpu_custom_call.1} parent=5 // pred_region
        %s131 = ssub.s32 %s12, 1
        // Predicated region
        $region29: #{tpu_custom_call.1} parent=27 // pred_check
          %p132 = pneg %p59
        $region30: #{tpu_custom_call.1} parent=27 // pred_check_branch
          %134 = sbr.rel (%p132) target = $region32
        $region31: #{tpu_custom_call.1} parent=27 // pred_region
          %136 = dma.done [#allocation3], 2048
        $region32: #{tpu_custom_call.1} parent=27 // pred_fallthru
          _
        %p137 = scmp.lt.s32.totalorder %s17, 1
        %s138 = scalar_select %p137, %s17, 1
        %s139 = smul.addr %s138, 4
        %s140 = scalar_lea.vmem %s0, %s139
        %p141 = pneg %p38
        %p142 = pneg %p35
        %p143 = pneg %p59
        %p144 = pneg %p56
        %p145 = pneg %p85
        %p146 = pneg %p82
        %s147 = sand.u32 %s72, 1
        %s148 = scalar_lea.sflag [#allocation4], %s147
        %s149 = sand.u32 %s72, 1
        %s150 = smul.addr %s149, 8
        %s151 = scalar_lea.vmem [#allocation5], %s150
        %p152 = scmp.lt.s32.totalorder %s17, 1
        %s153 = scalar_select %p152, %s17, 1
        %s154 = smul.addr %s153, 4
        %s155 = scalar_lea.vmem %s0, %s154
        %v156 = vld [vmem:[%s155] sm:$0x7]
        %v157 = vld [vmem:[#allocation2] sm:$0xff]
        %159 = vset.pattern.permute.xlu0 3
        %160 = vperm.xlu0 %159, %v157
        %v161 = vpop.permute.xlu0 %160
        %vm163 = vcmask 23552
        %v164 = vsel %vm163, %v157, 0
        %vm166 = vcmask 1042432
        %v168 = vsel %vm166, %v156, 0
        %170 = vmatpush.msra.mxu0 0.0
        %171 = vmatpush.msra.mxu0 0.0
        %172 = vmatpush.msra.mxu0 0.0
        %173 = vmatpush.msra.mxu0 0.0
        %174 = vmatpush.msra.mxu0 0.0
        %175 = vmatpush.msra.mxu0 0.0
        %176 = vmatpush.msra.mxu0 0.0
        %177 = vmatpush.msra.mxu0 0.0
        %178 = vmatpush.msra.mxu0 0.0
        %179 = vmatpush.msra.mxu0 0.0
        %180 = vmatpush.msra.mxu0 0.0
        %181 = vmatpush.msra.mxu0 0.0
        %182 = vmatpush.msra.mxu0 0.0
        %183 = vmatpush.msra.mxu0 0.0
        %184 = vmatpush.msra.mxu0 0.0
        %185 = vmatpush.msra.mxu0 %v168
        %186 = vmatmul.f32.gmra.mxu0 %v164
        %v187 = vpop.f32.mrf.mxu0
        %v188 = vadd.f32 %v161, %v187
        %189 = vdwg.mxu0
        %v190 = vmax.f32 %v188, 0.0
        %v191 = vld [vmem:[#allocation2 + $0x8] sm:$0xff]
        %v192 = vld [vmem:[#allocation2 + $0x10] sm:$0xff]
        %194 = vset.pattern.permute.xlu0 8
        %195 = vperm.xlu0 %194, %v191
        %v196 = vpop.permute.xlu0 %195
        %199 = vset.pattern.permute.xlu0 8
        %200 = vperm.xlu0 %199, %v192
        %v201 = vpop.permute.xlu0 %200
        %vm203 = vcmask 64512
        %v204 = vsel %vm203, %v191, 0
        %v206 = vsel %vm203, %v192, 0
        %208 = vmatpush.msra.mxu0 0.0
        %209 = vmatpush.msra.mxu0 0.0
        %210 = vmatpush.msra.mxu0 0.0
        %211 = vmatpush.msra.mxu0 0.0
        %212 = vmatpush.msra.mxu0 0.0
        %213 = vmatpush.msra.mxu0 0.0
        %214 = vmatpush.msra.mxu0 0.0
        %215 = vmatpush.msra.mxu0 0.0
        %216 = vmatpush.msra.mxu0 0.0
        %217 = vmatpush.msra.mxu0 0.0
        %218 = vmatpush.msra.mxu0 0.0
        %219 = vmatpush.msra.mxu0 0.0
        %220 = vmatpush.msra.mxu0 0.0
        %221 = vmatpush.msra.mxu0 0.0
        %222 = vmatpush.msra.mxu0 0.0
        %223 = vmatpush.msra.mxu0 %v190
        %224 = vmatmul.f32.gmra.mxu0 %v204
        %v225 = vpop.f32.mrf.mxu0
        %v226 = vadd.f32 %v196, %v225
        %227 = vmatmul.f32.gmra.mxu0 %v206
        %v228 = vpop.f32.mrf.mxu0
        %v229 = vadd.f32 %v201, %v228
        %230 = vdwg.mxu0
        %v231 = vmax.f32 %v226, 0.0
        %v232 = vmax.f32 %v229, 0.0
        %v233 = vld [vmem:[#allocation2 + $0x18] sm:$0xff]
        %v234 = vld [vmem:[#allocation2 + $0x20] sm:$0xff]
        %236 = vset.pattern.permute.xlu0 16
        %237 = vperm.xlu0 %236, %v233
        %v238 = vpop.permute.xlu0 %237
        %241 = vset.pattern.permute.xlu0 16
        %242 = vperm.xlu0 %241, %v234
        %v243 = vpop.permute.xlu0 %242
        %vm245 = vcmask 130048
        %v246 = vsel %vm245, %v233, 0
        %v248 = vsel %vm245, %v234, 0
        %250 = vmatpush.msra.mxu0 0.0
        %251 = vmatpush.msra.mxu0 0.0
        %252 = vmatpush.msra.mxu0 0.0
        %253 = vmatpush.msra.mxu0 0.0
        %254 = vmatpush.msra.mxu0 0.0
        %255 = vmatpush.msra.mxu0 0.0
        %256 = vmatpush.msra.mxu0 0.0
        %257 = vmatpush.msra.mxu0 0.0
        %258 = vmatpush.msra.mxu0 0.0
        %259 = vmatpush.msra.mxu0 0.0
        %260 = vmatpush.msra.mxu0 0.0
        %261 = vmatpush.msra.mxu0 0.0
        %262 = vmatpush.msra.mxu0 0.0
        %263 = vmatpush.msra.mxu0 0.0
        %264 = vmatpush.msra.mxu0 %v232
        %265 = vmatpush.msra.mxu0 %v231
        %266 = vmatmul.f32.gmra.mxu0 %v246
        %v267 = vpop.f32.mrf.mxu0
        %v268 = vadd.f32 %v238, %v267
        %269 = vmatmul.f32.gmra.mxu0 %v248
        %v270 = vpop.f32.mrf.mxu0
        %v271 = vadd.f32 %v243, %v270
        %272 = vdwg.mxu0
        %v273 = vmax.f32 %v268, 0.0
        %v274 = vmax.f32 %v271, 0.0
        %v275 = vld [vmem:[#allocation2 + $0x28] sm:$0xff]
        %v276 = vld [vmem:[#allocation2 + $0x30] sm:$0xff]
        %v277 = vld [vmem:[#allocation2 + $0x38] sm:$0xff]
        %v278 = vld [vmem:[#allocation2 + $0x40] sm:$0xff]
        %280 = vset.pattern.permute.xlu0 16
        %281 = vperm.xlu0 %280, %v275
        %v282 = vpop.permute.xlu0 %281
        %285 = vset.pattern.permute.xlu0 16
        %286 = vperm.xlu0 %285, %v276
        %v287 = vpop.permute.xlu0 %286
        %290 = vset.pattern.permute.xlu0 16
        %291 = vperm.xlu0 %290, %v277
        %v292 = vpop.permute.xlu0 %291
        %295 = vset.pattern.permute.xlu0 16
        %296 = vperm.xlu0 %295, %v278
        %v297 = vpop.permute.xlu0 %296
        %v299 = vsel %vm245, %v275, 0
        %v301 = vsel %vm245, %v276, 0
        %v303 = vsel %vm245, %v277, 0
        %v305 = vsel %vm245, %v278, 0
        %307 = vmatpush.msra.mxu0 0.0
        %308 = vmatpush.msra.mxu0 0.0
        %309 = vmatpush.msra.mxu0 0.0
        %310 = vmatpush.msra.mxu0 0.0
        %311 = vmatpush.msra.mxu0 0.0
        %312 = vmatpush.msra.mxu0 0.0
        %313 = vmatpush.msra.mxu0 0.0
        %314 = vmatpush.msra.mxu0 0.0
        %315 = vmatpush.msra.mxu0 0.0
        %316 = vmatpush.msra.mxu0 0.0
        %317 = vmatpush.msra.mxu0 0.0
        %318 = vmatpush.msra.mxu0 0.0
        %319 = vmatpush.msra.mxu0 0.0
        %320 = vmatpush.msra.mxu0 0.0
        %321 = vmatpush.msra.mxu0 %v274
        %322 = vmatpush.msra.mxu0 %v273
        %323 = vmatmul.f32.gmra.mxu0 %v299
        %v324 = vpop.f32.mrf.mxu0
        %v325 = vadd.f32 %v282, %v324
        %326 = vmatmul.f32.gmra.mxu0 %v301
        %v327 = vpop.f32.mrf.mxu0
        %v328 = vadd.f32 %v287, %v327
        %329 = vmatmul.f32.gmra.mxu0 %v303
        %v330 = vpop.f32.mrf.mxu0
        %v331 = vadd.f32 %v292, %v330
        %332 = vmatmul.f32.gmra.mxu0 %v305
        %v333 = vpop.f32.mrf.mxu0
        %v334 = vadd.f32 %v297, %v333
        %335 = vdwg.mxu0
        %v336 = vmax.f32 %v325, 0.0
        %v337 = vmax.f32 %v328, 0.0
        %v338 = vmax.f32 %v331, 0.0
        %v339 = vmax.f32 %v334, 0.0
        %340 = vmax.xlane.f32.xlu0 %v336
        %v341 = vpop.xlane.xlu0 %340
        %342 = vmax.xlane.f32.xlu0 %v337
        %v343 = vpop.xlane.xlu0 %342
        %344 = vmax.xlane.f32.xlu0 %v338
        %v345 = vpop.xlane.xlu0 %344
        %346 = vmax.xlane.f32.xlu0 %v339
        %v347 = vpop.xlane.xlu0 %346
        %v348 = vld [vmem:[#allocation2 + $0x48] sm:$0xff]
        %v349 = vld [vmem:[#allocation2 + $0x50] sm:$0xff]
        %v350 = vld [vmem:[#allocation2 + $0x58] sm:$0xff]
        %v351 = vld [vmem:[#allocation2 + $0x60] sm:$0xff]
        %356 = vrot.lane.b32.xlu0 %v348, 112
        %v357 = vpop.permute.xlu0 %356
        %358 = vrot.lane.b32.xlu0 %v349, 112
        %v359 = vpop.permute.xlu0 %358
        %360 = vrot.lane.b32.xlu0 %v350, 112
        %v361 = vpop.permute.xlu0 %360
        %362 = vrot.lane.b32.xlu0 %v351, 112
        %v363 = vpop.permute.xlu0 %362
        %vm364 = vcmask 261120
        %v365 = vsel %vm364, %v357, 0
        %v367 = vsel %vm364, %v359, 0
        %v369 = vsel %vm364, %v361, 0
        %v371 = vsel %vm364, %v363, 0
        %373 = vmatpush.msra.mxu0 0.0
        %374 = vmatpush.msra.mxu0 0.0
        %375 = vmatpush.msra.mxu0 0.0
        %376 = vmatpush.msra.mxu0 0.0
        %377 = vmatpush.msra.mxu0 0.0
        %378 = vmatpush.msra.mxu0 0.0
        %379 = vmatpush.msra.mxu0 0.0
        %380 = vmatpush.msra.mxu0 0.0
        %381 = vmatpush.msra.mxu0 0.0
        %382 = vmatpush.msra.mxu0 0.0
        %383 = vmatpush.msra.mxu0 0.0
        %384 = vmatpush.msra.mxu0 0.0
        %385 = vmatpush.msra.mxu0 %v347
        %386 = vmatpush.msra.mxu0 %v345
        %387 = vmatpush.msra.mxu0 %v343
        %388 = vmatpush.msra.mxu0 %v341
        %389 = vmatmul.f32.gmra.mxu0 %v365
        %v390 = vpop.f32.mrf.mxu0
        %v391 = vadd.f32 0.0, %v390
        %392 = vmatmul.f32.gmra.mxu0 %v367
        %v393 = vpop.f32.mrf.mxu0
        %v394 = vadd.f32 0.0, %v393
        %395 = vmatmul.f32.gmra.mxu0 %v369
        %v396 = vpop.f32.mrf.mxu0
        %v397 = vadd.f32 0.0, %v396
        %398 = vmatmul.f32.gmra.mxu0 %v371
        %v399 = vpop.f32.mrf.mxu0
        %v400 = vadd.f32 0.0, %v399
        %401 = vdwg.mxu0
        %403 = vset.pattern.permute.xlu0 0
        %404 = vperm.xlu0 %403, %v391
        %v405 = vpop.permute.xlu0 %404
        %408 = vset.pattern.permute.xlu0 0
        %409 = vperm.xlu0 %408, %v394
        %v410 = vpop.permute.xlu0 %409
        %413 = vset.pattern.permute.xlu0 0
        %414 = vperm.xlu0 %413, %v397
        %v415 = vpop.permute.xlu0 %414
        %418 = vset.pattern.permute.xlu0 0
        %419 = vperm.xlu0 %418, %v400
        %v420 = vpop.permute.xlu0 %419
        %v422 = vsel %vm245, %v348, 0
        %v424 = vsel %vm245, %v349, 0
        %v426 = vsel %vm245, %v350, 0
        %v428 = vsel %vm245, %v351, 0
        %430 = vmatpush.msra.mxu0 0.0
        %431 = vmatpush.msra.mxu0 0.0
        %432 = vmatpush.msra.mxu0 0.0
        %433 = vmatpush.msra.mxu0 0.0
        %434 = vmatpush.msra.mxu0 0.0
        %435 = vmatpush.msra.mxu0 0.0
        %436 = vmatpush.msra.mxu0 0.0
        %437 = vmatpush.msra.mxu0 0.0
        %438 = vmatpush.msra.mxu0 0.0
        %439 = vmatpush.msra.mxu0 0.0
        %440 = vmatpush.msra.mxu0 0.0
        %441 = vmatpush.msra.mxu0 0.0
        %442 = vmatpush.msra.mxu0 0.0
        %443 = vmatpush.msra.mxu0 0.0
        %444 = vmatpush.msra.mxu0 %v232
        %445 = vmatpush.msra.mxu0 %v231
        %446 = vmatmul.f32.gmra.mxu0 %v422
        %v447 = vpop.f32.mrf.mxu0
        %v448 = vadd.f32 %v405, %v447
        %449 = vmatmul.f32.gmra.mxu0 %v424
        %v450 = vpop.f32.mrf.mxu0
        %v451 = vadd.f32 %v410, %v450
        %452 = vmatmul.f32.gmra.mxu0 %v426
        %v453 = vpop.f32.mrf.mxu0
        %v454 = vadd.f32 %v415, %v453
        %455 = vmatmul.f32.gmra.mxu0 %v428
        %v456 = vpop.f32.mrf.mxu0
        %v457 = vadd.f32 %v420, %v456
        %458 = vdwg.mxu0
        %459 = vset.pattern.permute.xlu0 48
        %460 = vperm.xlu0 %459, %v348
        %v461 = vpop.permute.xlu0 %460
        %463 = vset.pattern.permute.xlu0 48
        %464 = vperm.xlu0 %463, %v349
        %v465 = vpop.permute.xlu0 %464
        %467 = vset.pattern.permute.xlu0 48
        %468 = vperm.xlu0 %467, %v350
        %v469 = vpop.permute.xlu0 %468
        %471 = vset.pattern.permute.xlu0 48
        %472 = vperm.xlu0 %471, %v351
        %v473 = vpop.permute.xlu0 %472
        %v475 = vadd.f32 %v448, %v461
        %v476 = vadd.f32 %v451, %v465
        %v477 = vadd.f32 %v454, %v469
        %v478 = vadd.f32 %v457, %v473
        %v479 = vmax.f32 %v475, 0.0
        %v480 = vmax.f32 %v476, 0.0
        %v481 = vmax.f32 %v477, 0.0
        %v482 = vmax.f32 %v478, 0.0
        %v483 = vld [vmem:[#allocation2 + $0x68] sm:$0xff]
        %v484 = vld [vmem:[#allocation2 + $0x70] sm:$0xff]
        %486 = vset.pattern.permute.xlu0 32
        %487 = vperm.xlu0 %486, %v483
        %v488 = vpop.permute.xlu0 %487
        %491 = vset.pattern.permute.xlu0 32
        %492 = vperm.xlu0 %491, %v484
        %v493 = vpop.permute.xlu0 %492
        %v495 = vsel %vm364, %v483, 0
        %v497 = vsel %vm364, %v484, 0
        %499 = vmatpush.msra.mxu0 0.0
        %500 = vmatpush.msra.mxu0 0.0
        %501 = vmatpush.msra.mxu0 0.0
        %502 = vmatpush.msra.mxu0 0.0
        %503 = vmatpush.msra.mxu0 0.0
        %504 = vmatpush.msra.mxu0 0.0
        %505 = vmatpush.msra.mxu0 0.0
        %506 = vmatpush.msra.mxu0 0.0
        %507 = vmatpush.msra.mxu0 0.0
        %508 = vmatpush.msra.mxu0 0.0
        %509 = vmatpush.msra.mxu0 0.0
        %510 = vmatpush.msra.mxu0 0.0
        %511 = vmatpush.msra.mxu0 %v482
        %512 = vmatpush.msra.mxu0 %v481
        %513 = vmatpush.msra.mxu0 %v480
        %514 = vmatpush.msra.mxu0 %v479
        %515 = vmatmul.f32.gmra.mxu0 %v495
        %v516 = vpop.f32.mrf.mxu0
        %v517 = vadd.f32 %v488, %v516
        %518 = vmatmul.f32.gmra.mxu0 %v497
        %v519 = vpop.f32.mrf.mxu0
        %v520 = vadd.f32 %v493, %v519
        %521 = vdwg.mxu0
        %v522 = vmax.f32 %v517, 0.0
        %v523 = vmax.f32 %v520, 0.0
        %v524 = vld [vmem:[#allocation2 + $0x78] sm:$0xff]
        %526 = vset.pattern.permute.xlu0 16
        %527 = vperm.xlu0 %526, %v524
        %v528 = vpop.permute.xlu0 %527
        %v530 = vsel %vm245, %v524, 0
        %532 = vmatpush.msra.mxu0 0.0
        %533 = vmatpush.msra.mxu0 0.0
        %534 = vmatpush.msra.mxu0 0.0
        %535 = vmatpush.msra.mxu0 0.0
        %536 = vmatpush.msra.mxu0 0.0
        %537 = vmatpush.msra.mxu0 0.0
        %538 = vmatpush.msra.mxu0 0.0
        %539 = vmatpush.msra.mxu0 0.0
        %540 = vmatpush.msra.mxu0 0.0
        %541 = vmatpush.msra.mxu0 0.0
        %542 = vmatpush.msra.mxu0 0.0
        %543 = vmatpush.msra.mxu0 0.0
        %544 = vmatpush.msra.mxu0 0.0
        %545 = vmatpush.msra.mxu0 0.0
        %546 = vmatpush.msra.mxu0 %v523
        %547 = vmatpush.msra.mxu0 %v522
        %548 = vmatmul.f32.gmra.mxu0 %v530
        %v549 = vpop.f32.mrf.mxu0
        %v550 = vadd.f32 %v528, %v549
        %551 = vdwg.mxu0
        %v552 = vmax.f32 %v550, 0.0
        %553 = vst [vmem:[%s151] sm:$0xff] %v552
        %s554 = sand.u32 %s72, 1
        %s555 = scalar_lea.sflag [#allocation4], %s554
        %s556 = sand.u32 %s72, 1
        %s557 = smul.addr %s556, 8
        %s558 = scalar_lea.vmem [#allocation5], %s557
        // Predicated region
        $region33: #{tpu_custom_call.1} parent=27 // pred_check
          %p559 = pneg %p82
        $region34: #{tpu_custom_call.1} parent=27 // pred_check_branch
          %561 = sbr.rel (%p559) target = $region36
        $region35: #{tpu_custom_call.1} parent=27 // pred_region
          %563 = vsyncadd %s555, 0
          %s564 = smul.addr %s17, 8
          %s565 = scalar_lea.hbm %s2, %s564
          %s567 = sshll.u32 %s558, 4
          %s568 = int_to_ptr.vmem [resolvable:$true] %s567
          %s569 = sshll.u32 %s565, 4
          %s570 = int_to_ptr.hbm [resolvable:$true] %s569
          %572 = dma.vmem_to_hbm [thread:$0]  %s568, 128, %s570, %s555
        $region36: #{tpu_custom_call.1} parent=27 // pred_fallthru
          _
      $region28: #{tpu_custom_call.1} parent=5 // pred_fallthru
        _
      %p573 = scmp.le.s32.totalorder 2, %s12
      // Predicated region
      $region37: #{tpu_custom_call.1} parent=5 // pred_check
        %p574 = pneg %p573
      $region38: #{tpu_custom_call.1} parent=5 // pred_check_branch
        %576 = sbr.rel (%p574) target = $region40
      $region39: #{tpu_custom_call.1} parent=5 // pred_region
        %s577 = ssub.s32 %s12, 2
        // Predicated region
        $region41: #{tpu_custom_call.1} parent=39 // pred_check
          %p578 = pneg %p88
        $region42: #{tpu_custom_call.1} parent=39 // pred_check_branch
          %580 = sbr.rel (%p578) target = $region44
        $region43: #{tpu_custom_call.1} parent=39 // pred_region
          %s581 = sand.u32 %s73, 1
          %s582 = scalar_lea.sflag [#allocation4], %s581
          %s583 = sand.u32 %s73, 1
          %s584 = smul.addr %s583, 8
          %s585 = scalar_lea.vmem [#allocation5], %s584
          %587 = dma.done %s582, 128
        $region44: #{tpu_custom_call.1} parent=39 // pred_fallthru
          _
      $region40: #{tpu_custom_call.1} parent=5 // pred_fallthru
        _
    $region6: #{tpu_custom_call.1} parent=1 // loop_footer
      %s16 = sadd.s32 1, %s12
    $region7: #{tpu_custom_call.1} parent=1 // loop_footer_branch
      %11 = sbr.rel target = $region3
    $region8: #{tpu_custom_call.1} parent=1 // loop_exit
      _
    %588 = vsyncpa [#allocation3], 1
    %s589 = scalar_lea.sflag [#allocation3], 1
    %590 = vsyncpa %s589, 1
    %591 = vsyncpa [#allocation4], 1
    %s592 = scalar_lea.sflag [#allocation4], 1
    %593 = vsyncpa %s592, 1

</llo_original>
